<compile_context>
chip_gen: v7x
topology: tpu7x:2x2x1
jax: 0.10.0
libtpu: 0.0.40
codegen_flags: <defaults>
</compile_context>

<pallas_src>
import jax
import jax.numpy as jnp
from jax.experimental import pallas as pl
from jax.experimental.pallas import tpu as pltpu


def _gated_attention_kernel(x_ref, wvu_ref, bvu_ref, wwt_ref, bw_ref, z_ref, s_ref):
    bblk, n, d = x_ref.shape
    x3 = x_ref[...]                                    # (bblk, N, D)
    x2 = x3.reshape(bblk * n, d)                       # leading-dim collapse (layout-free)

    # Fused gate projection on the MXU: [V | U] in one wide matmul.
    g = (jnp.dot(x2, wvu_ref[...], preferred_element_type=jnp.float32)
         + bvu_ref[...])                               # (bblk*N, 2D)
    gated = jnp.tanh(g[:, :d]) * jax.nn.sigmoid(g[:, d:])   # (bblk*N, D)
    gated3 = gated.reshape(bblk, n, d)                 # (bblk, N, D)

    # Attention logits, lane-dense (N on the lane axis): (bblk, 1, N).
    ww = jnp.broadcast_to(wwt_ref[...].reshape(1, 1, d), (bblk, 1, d))
    logits = (jnp.einsum('bqd,bnd->bqn', ww, gated3,
                         preferred_element_type=jnp.float32)
              + bw_ref[0])                             # scalar bias from SMEM

    # Softmax over the instance axis (last axis here == PyTorch dim=1).
    m = jnp.max(logits, axis=-1, keepdims=True)
    e = jnp.exp(logits - m)
    attn = e * pl.reciprocal(jnp.sum(e, axis=-1, keepdims=True), approx=True)

    # Weighted pooling on the MXU: z[b] = attn[b] @ x[b]  -> (bblk, 1, D).
    z = jnp.einsum('bqn,bnd->bqd', attn, x3, preferred_element_type=jnp.float32)

    z_ref[...] = z.astype(z_ref.dtype)                 # (bblk, 1, D)
    s_ref[...] = attn.astype(s_ref.dtype)              # (bblk, 1, N)  lane-dense store


def _pick_batch_block(B, N, target_rows=256):
    """Batch elements per grid step.

    Aim for >=256 rows per projection matmul (v6e/v7x MXU; 128 is enough on v5e),
    but keep >=2 grid steps along the 'parallel' axis so both v7x TensorCores get work.
    Must divide B so all blocks are full.
    """
    cap = max(1, target_rows // max(N, 1))
    if B >= 2:
        cap = min(cap, max(1, B // 2))
    best = 1
    for cand in range(1, min(B, cap) + 1):
        if B % cand == 0:
            best = cand
    return best


def attention_head_forward(x, params):
    """x: (B, N, D) float32 bag-level sequence.

    Returns (z: (B, D), attn_score: (B, N, 1)) matching the PyTorch forward math.
    """
    B, N, D = x.shape
    wv, bv, wu, bu, ww, bw = params   # (D,D),(1,D),(D,D),(1,D),(D,1),(1,1)

    # Pack the two gate projections into one matmul; present Ww as a (1, D) row.
    wvu = jnp.concatenate([wv, wu], axis=1)            # (D, 2D)
    bvu = jnp.concatenate([bv, bu], axis=1)            # (1, 2D)
    ww_row = ww.reshape(1, D)                          # (1, D)  == Ww^T
    bw_s = bw.reshape((1,))                            # scalar -> SMEM

    bblk = _pick_batch_block(B, N)
    grid = (B // bblk,)

    z3, s3 = pl.pallas_call(
        _gated_attention_kernel,
        out_shape=(
            jax.ShapeDtypeStruct((B, 1, D), jnp.float32),
            jax.ShapeDtypeStruct((B, 1, N), jnp.float32),
        ),
        grid_spec=pltpu.PrefetchScalarGridSpec(
            num_scalar_prefetch=0,
            grid=grid,
            in_specs=[
                pl.BlockSpec((bblk, N, D), lambda b: (b, 0, 0)),     # x block
                pl.BlockSpec((D, 2 * D), lambda b: (0, 0)),          # fused Wv|Wu
                pl.BlockSpec((1, 2 * D), lambda b: (0, 0)),          # fused bv|bu
                pl.BlockSpec((1, D), lambda b: (0, 0)),              # Ww^T row
                pl.BlockSpec(memory_space=pltpu.MemorySpace.SMEM),   # bw scalar
            ],
            out_specs=[
                pl.BlockSpec((bblk, 1, D), lambda b: (b, 0, 0)),     # z
                pl.BlockSpec((bblk, 1, N), lambda b: (b, 0, 0)),     # attn score (lane-dense)
            ],
        ),
        compiler_params=pltpu.CompilerParams(
            dimension_semantics=("parallel",)),
    )(x, wvu, bvu, ww_row, bw_s)

    z = z3.reshape(B, D)
    score = s3.reshape(B, N, 1)   # back to the PyTorch softmax(dim=1) output shape
    return z, score


def init_params(key, n_dim):
    """Deterministic synthetic parameters matching nn.Linear shapes (transposed)."""
    ks = jax.random.split(key, 6)
    scale = 1.0 / jnp.sqrt(n_dim)
    wv = jax.random.uniform(ks[0], (n_dim, n_dim), jnp.float32, -scale, scale)
    bv = jax.random.uniform(ks[1], (1, n_dim), jnp.float32, -scale, scale)
    wu = jax.random.uniform(ks[2], (n_dim, n_dim), jnp.float32, -scale, scale)
    bu = jax.random.uniform(ks[3], (1, n_dim), jnp.float32, -scale, scale)
    ww = jax.random.uniform(ks[4], (n_dim, 1), jnp.float32, -scale, scale)
    bw = jax.random.uniform(ks[5], (1, 1), jnp.float32, -scale, scale)
    return wv, bv, wu, bu, ww, bw


def attention_head_ref(x, params):
    """Plain-JAX reference mirroring the PyTorch forward math."""
    wv, bv, wu, bu, ww, bw = params
    v = jnp.tanh(x @ wv + bv)                          # (B, N, D)
    u = jax.nn.sigmoid(x @ wu + bu)                    # (B, N, D)
    s = (v * u) @ ww + bw                              # (B, N, 1)
    a = jax.nn.softmax(s, axis=1)                      # softmax over instances
    z = jnp.sum(a * x, axis=1)                         # (B, D)
    return z, a


if __name__ == "__main__":
    B, N, D = 2, 8, 32   # small shapes: batch=2, instances=8, n_dim=32
    key = jax.random.PRNGKey(0)
    kx, kp = jax.random.split(key)
    x = jax.random.normal(kx, (B, N, D), dtype=jnp.float32)
    params = init_params(kp, D)

    z, score = attention_head_forward(x, params)
    z = jax.block_until_ready(z)
    score = jax.block_until_ready(score)

    z_ref, score_ref = attention_head_ref(x, params)
    # Tolerance relaxed vs 1e-5 because the softmax denominator uses the
    # approximate EUP reciprocal (pl.reciprocal(..., approx=True)).
    assert jnp.allclose(z, z_ref, atol=2e-3, rtol=2e-3)
    assert jnp.allclose(score, score_ref, atol=2e-3, rtol=2e-3)

    print("KERNEL_OK")
</pallas_src>

<mosaic_0001>
module attributes {stable_mosaic.version = 11 : i64} {
  func.func @_gated_attention_kernel(%arg0: i32, %arg1: memref<1x8x32xf32, #tpu.memory_space<vmem>>, %arg2: memref<32x64xf32, #tpu.memory_space<vmem>>, %arg3: memref<1x64xf32, #tpu.memory_space<vmem>>, %arg4: memref<1x32xf32, #tpu.memory_space<vmem>>, %arg5: memref<1xf32, #tpu.memory_space<smem>>, %arg6: memref<1x1x32xf32, #tpu.memory_space<vmem>>, %arg7: memref<1x1x8xf32, #tpu.memory_space<vmem>>) attributes {dimension_semantics = [#tpu.dimension_semantics<parallel>], iteration_bounds = array<i64: 2>, scalar_prefetch = 0 : i64, scratch_operands = 0 : i64, tpu.core_type = #tpu.core_type<tc>, window_params = [{transform_indices = @transform_0, window_bounds = array<i64: 1, 8, 32>}, {pipeline_mode = #tpu.pipeline_mode<synchronous>, transform_indices = @transform_1, window_bounds = array<i64: 32, 64>}, {pipeline_mode = #tpu.pipeline_mode<synchronous>, transform_indices = @transform_2, window_bounds = array<i64: 1, 64>}, {pipeline_mode = #tpu.pipeline_mode<synchronous>, transform_indices = @transform_3, window_bounds = array<i64: 1, 32>}, {transform_indices = @transform_4, window_bounds = array<i64: 1>}, {transform_indices = @transform_5, window_bounds = array<i64: 1, 1, 32>}, {transform_indices = @transform_6, window_bounds = array<i64: 1, 1, 8>}]} {
    %c0 = arith.constant 0 : index
    %c0_0 = arith.constant 0 : index
    %c0_1 = arith.constant 0 : index
    %0 = vector.load %arg1[%c0, %c0_0, %c0_1] : memref<1x8x32xf32, #tpu.memory_space<vmem>>, vector<1x8x32xf32>
    %1 = vector.shape_cast %0 : vector<1x8x32xf32> to vector<8x32xf32>
    %c0_2 = arith.constant 0 : index
    %c0_3 = arith.constant 0 : index
    %2 = vector.load %arg2[%c0_2, %c0_3] : memref<32x64xf32, #tpu.memory_space<vmem>>, vector<32x64xf32>
    %cst = arith.constant dense<0.000000e+00> : vector<8x64xf32>
    %3 = tpu.matmul %1, %2, %cst {dimension_numbers = #tpu.dot_dimension_numbers<[1], [0], [0], [1], [0, 0, 1, 1], [], []>} : vector<8x32xf32>, vector<32x64xf32>, vector<8x64xf32> -> vector<8x64xf32>
    %c0_4 = arith.constant 0 : index
    %c0_5 = arith.constant 0 : index
    %4 = vector.load %arg3[%c0_4, %c0_5] : memref<1x64xf32, #tpu.memory_space<vmem>>, vector<1x64xf32>
    %5 = vector.broadcast %4 : vector<1x64xf32> to vector<8x64xf32>
    %6 = arith.addf %3, %5 : vector<8x64xf32>
    %7 = vector.extract_strided_slice %6 {offsets = [0, 0], sizes = [8, 32], strides = [1, 1]} : vector<8x64xf32> to vector<8x32xf32>
    %8 = math.tanh %7 : vector<8x32xf32>
    %9 = vector.extract_strided_slice %6 {offsets = [0, 32], sizes = [8, 32], strides = [1, 1]} : vector<8x64xf32> to vector<8x32xf32>
    %10 = arith.negf %9 : vector<8x32xf32>
    %11 = math.exp %10 : vector<8x32xf32>
    %cst_6 = arith.constant 1.000000e+00 : f32
    %12 = vector.broadcast %cst_6 : f32 to vector<8x32xf32>
    %13 = arith.addf %12, %11 : vector<8x32xf32>
    %14 = arith.divf %12, %13 : vector<8x32xf32>
    %15 = arith.mulf %8, %14 : vector<8x32xf32>
    %16 = vector.shape_cast %15 : vector<8x32xf32> to vector<1x8x32xf32>
    %c0_7 = arith.constant 0 : index
    %c0_8 = arith.constant 0 : index
    %17 = vector.load %arg4[%c0_7, %c0_8] : memref<1x32xf32, #tpu.memory_space<vmem>>, vector<1x32xf32>
    %18 = vector.shape_cast %17 : vector<1x32xf32> to vector<1x1x32xf32>
    "tpu.trace_start"() <{level = 10 : i32, message = "bqd,bnd->bqn"}> : () -> ()
    %cst_9 = arith.constant dense<0.000000e+00> : vector<1x1x8xf32>
    %19 = tpu.matmul %18, %16, %cst_9 {dimension_numbers = #tpu.dot_dimension_numbers<[2], [2], [1], [1], [0, 0, 0, 1, 1, 1], [0], [0]>} : vector<1x1x32xf32>, vector<1x8x32xf32>, vector<1x1x8xf32> -> vector<1x1x8xf32>
    "tpu.trace_stop"() : () -> ()
    %c0_10 = arith.constant 0 : index
    %20 = memref.load %arg5[%c0_10] : memref<1xf32, #tpu.memory_space<smem>>
    %21 = vector.broadcast %20 : f32 to vector<1x1x8xf32>
    %22 = arith.addf %19, %21 : vector<1x1x8xf32>
    %cst_11 = arith.constant dense<0xFF800000> : vector<1x1xf32>
    %23 = vector.multi_reduction <maximumf>, %22, %cst_11 [2] : vector<1x1x8xf32> to vector<1x1xf32>
    %24 = vector.shape_cast %23 : vector<1x1xf32> to vector<1x1x1xf32>
    %25 = vector.broadcast %24 : vector<1x1x1xf32> to vector<1x1x8xf32>
    %26 = arith.subf %22, %25 : vector<1x1x8xf32>
    %27 = math.exp %26 : vector<1x1x8xf32>
    %cst_12 = arith.constant dense<0.000000e+00> : vector<1x1xf32>
    %28 = vector.multi_reduction <add>, %27, %cst_12 [2] : vector<1x1x8xf32> to vector<1x1xf32>
    %29 = vector.shape_cast %28 : vector<1x1xf32> to vector<1x1x1xf32>
    %30 = tpu.reciprocal %29 {approx = true} : vector<1x1x1xf32> -> vector<1x1x1xf32>
    %31 = vector.broadcast %30 : vector<1x1x1xf32> to vector<1x1x8xf32>
    %32 = arith.mulf %27, %31 : vector<1x1x8xf32>
    "tpu.trace_start"() <{level = 10 : i32, message = "bqn,bnd->bqd"}> : () -> ()
    %cst_13 = arith.constant dense<0.000000e+00> : vector<1x1x32xf32>
    %33 = tpu.matmul %32, %0, %cst_13 {dimension_numbers = #tpu.dot_dimension_numbers<[2], [1], [1], [2], [0, 0, 0, 1, 1, 2], [0], [0]>} : vector<1x1x8xf32>, vector<1x8x32xf32>, vector<1x1x32xf32> -> vector<1x1x32xf32>
    "tpu.trace_stop"() : () -> ()
    %c0_14 = arith.constant 0 : index
    %c0_15 = arith.constant 0 : index
    %c0_16 = arith.constant 0 : index
    %34 = vector.load %arg6[%c0_14, %c0_15, %c0_16] : memref<1x1x32xf32, #tpu.memory_space<vmem>>, vector<1x1x32xf32>
    tpu.vector_store %arg6[%c0_14, %c0_15, %c0_16], %33 {strides = array<i32>} : memref<1x1x32xf32, #tpu.memory_space<vmem>>, vector<1x1x32xf32>,
    %c0_17 = arith.constant 0 : index
    %c0_18 = arith.constant 0 : index
    %c0_19 = arith.constant 0 : index
    %35 = vector.load %arg7[%c0_17, %c0_18, %c0_19] : memref<1x1x8xf32, #tpu.memory_space<vmem>>, vector<1x1x8xf32>
    tpu.vector_store %arg7[%c0_17, %c0_18, %c0_19], %32 {strides = array<i32>} : memref<1x1x8xf32, #tpu.memory_space<vmem>>, vector<1x1x8xf32>,
    return
  }
  func.func @transform_0(%arg0: i32) -> (i32, i32, i32) {
    %c0_i32 = arith.constant 0 : i32
    %c0_i32_0 = arith.constant 0 : i32
    %c0_i32_1 = arith.constant 0 : i32
    return %arg0, %c0_i32, %c0_i32_0 : i32, i32, i32
  }
  func.func @transform_1(%arg0: i32) -> (i32, i32) {
    %c0_i32 = arith.constant 0 : i32
    %c0_i32_0 = arith.constant 0 : i32
    %c0_i32_1 = arith.constant 0 : i32
    return %c0_i32, %c0_i32_0 : i32, i32
  }
  func.func @transform_2(%arg0: i32) -> (i32, i32) {
    %c0_i32 = arith.constant 0 : i32
    %c0_i32_0 = arith.constant 0 : i32
    %c0_i32_1 = arith.constant 0 : i32
    return %c0_i32, %c0_i32_0 : i32, i32
  }
  func.func @transform_3(%arg0: i32) -> (i32, i32) {
    %c0_i32 = arith.constant 0 : i32
    %c0_i32_0 = arith.constant 0 : i32
    %c0_i32_1 = arith.constant 0 : i32
    return %c0_i32, %c0_i32_0 : i32, i32
  }
  func.func @transform_4(%arg0: i32) -> i32 {
    %c0_i32 = arith.constant 0 : i32
    %c0_i32_0 = arith.constant 0 : i32
    return %c0_i32 : i32
  }
  func.func @transform_5(%arg0: i32) -> (i32, i32, i32) {
    %c0_i32 = arith.constant 0 : i32
    %c0_i32_0 = arith.constant 0 : i32
    %c0_i32_1 = arith.constant 0 : i32
    return %arg0, %c0_i32, %c0_i32_0 : i32, i32, i32
  }
  func.func @transform_6(%arg0: i32) -> (i32, i32, i32) {
    %c0_i32 = arith.constant 0 : i32
    %c0_i32_0 = arith.constant 0 : i32
    %c0_i32_1 = arith.constant 0 : i32
    return %arg0, %c0_i32, %c0_i32_0 : i32, i32, i32
  }
}

</mosaic_0001>

<llo_original>
// kernel: tpu_custom_call.1
$region0: #{tpu_custom_call.1}
  #allocation0 [shape = 'u32[]', space=smem, size = 0x4, offset = 0x4, fixed_abs, tag = 'smem constant byte address 0x4 - core index']
  #allocation1 [shape = 'u32[144,128]{1,0:T(1,128)}', space=vmem, size = 0x12000, scoped, tag = 'internal scratch']
  #allocation2 [shape = 'f32[1]{0:T(128)S(6)}', space=smem, size = 0x200, scoped, tag = 'scoped memory for tpu_custom_call.1']
  %s0 = inlined_call_operand.hbm [shape: f32[2,8,32], index: 0, kind: input, shape index: {}]
  %s1 = inlined_call_operand.hbm [shape: f32[32,64], index: 1, kind: input, shape index: {}]
  %s2 = inlined_call_operand.vmem [shape: f32[1,64], index: 2, kind: input, shape index: {}]
  %s3 = inlined_call_operand.vmem [shape: f32[1,32], index: 3, kind: input, shape index: {}]
  %s4 = inlined_call_operand.<no memory space> [shape: f32[1], index: 4, kind: input, shape index: {}]
  %s5 = inlined_call_operand.hbm [shape: f32[2,1,32], index: 5, kind: output, shape index: {0}]
  %s6 = inlined_call_operand.hbm [shape: f32[2,1,8], index: 6, kind: output, shape index: {1}]
  %7 = xla_tuple %s5, %s6
  %s8 = sld [smem:[#allocation0]]
  $region69: #{tpu_custom_call.1} parent=0
    _
  %s10 = ssub.s32 1, %s8
  %s11 = scalar_select 0, %s10, %s8
  %12 = sst [smem:[#allocation2]] %s4
  $region1: #{tpu_custom_call.1} parent=0
    #allocation3 [shape = 'u8[8192]{0}', space=vmem, size = 0x2000, scoped, tag = 'input window, operand 0']
    #allocation4 [shape = 's32[2]{0}', space=sflag, size = 0x8, scoped, tag = 'scoped memory for tpu_custom_call.1']
    #allocation5 [shape = 's32[2]{0}', space=sflag, size = 0x8, scoped, tag = 'scoped memory for tpu_custom_call.1']
    #allocation6 [shape = 'u8[16384]{0}', space=vmem, size = 0x4000, scoped, tag = 'input window, operand 1, single buffered']
    #allocation7 [shape = 's32[1]{0}', space=sflag, size = 0x4, scoped, tag = 'scoped memory for tpu_custom_call.1']
    #allocation8 [shape = 'u8[1024]{0}', space=vmem, size = 0x400, scoped, tag = 'output window, operand 0']
    #allocation9 [shape = 'u8[1024]{0}', space=vmem, size = 0x400, scoped, tag = 'output window, operand 1']
    #allocation10 [shape = 's32[2]{0}', space=sflag, size = 0x8, scoped, tag = 'scoped memory for tpu_custom_call.1']
    %13 = vsyncpa [#allocation4], 0
    %s14 = scalar_lea.sflag [#allocation4], 1
    %15 = vsyncpa %s14, 0
    %16 = vsyncpa [#allocation7], 0
    %17 = vsyncpa [#allocation5], 0
    %s18 = scalar_lea.sflag [#allocation5], 1
    %19 = vsyncpa %s18, 0
    %20 = vsyncpa [#allocation10], 0
    %s21 = scalar_lea.sflag [#allocation10], 1
    %22 = vsyncpa %s21, 0
    loop: start=0, step=1, limit=4
    $region2: #{tpu_custom_call.1} parent=1 // loop_pre_header
      _
    $region3: #{tpu_custom_call.1} parent=1 // loop_header
      %s24 = sphi 0, %s28
      %p25 = scmp.ge.s32.totalorder %s24, 4
      %s34 = sphi 0, %s36
      %s37 = sphi 0, %s34
      %s38 = sphi 0, %s37
      %s54 = sphi 0, %s38
      %s58 = sphi 0, %s58
      %s60 = sphi 0, %s58
      %s61 = sphi 0, %s60
      %s75 = sphi 0, %s61
      %s79 = sphi 0, %s79
      %s81 = sphi 0, %s79
      %s82 = sphi 0, %s81
      %s96 = sphi 0, %s82
      %s100 = sphi 0, %s100
      %s102 = sphi 0, %s100
      %s103 = sphi 0, %s102
      %s117 = sphi 0, %s103
      %s121 = sphi 0, %s121
      %s123 = sphi 0, %s121
      %s124 = sphi 0, %s123
      %s138 = sphi 0, %s124
      %s144 = sphi 0, %s146
      %s147 = sphi 0, %s144
      %s148 = sphi 0, %s147
      %s164 = sphi 0, %s148
      %s170 = sphi 0, %s172
      %s173 = sphi 0, %s170
      %s174 = sphi 0, %s173
      %s190 = sphi 0, %s174
    $region4: #{tpu_custom_call.1} parent=1 // loop_header_branch
      %27 = sbr.rel (%p25) target = $region8
    $region5: #{tpu_custom_call.1} parent=1 // loop_body
      %s29 = ssub.s32 %s24, 1
      %s30 = ssub.s32 %s24, 2
      %s31 = sadd.s32 %s24, 1
      %s32 = ssub.s32 %s24, %s31
      %p33 = scmp.eq.s32.totalorder %s32, 0
      %s35 = sadd.s32 %s34, 1
      %s36 = scalar_select %p33, %s34, %s35
      %p39 = pneg %p33
      %p40 = scmp.eq.s32.totalorder %s24, 1
      %p41 = por %p39, %p40
      %p42 = scmp.ne.s32.totalorder %s34, %s37
      %p43 = scmp.eq.s32.totalorder %s24, 0
      %p44 = por %p42, %p43
      %p45 = scmp.ne.s32.totalorder %s34, %s37
      %p46 = scmp.eq.s32.totalorder %s29, 1
      %p47 = por %p45, %p46
      %p48 = scmp.ne.s32.totalorder %s37, %s38
      %p49 = scmp.eq.s32.totalorder %s29, 0
      %p50 = por %p48, %p49
      %p51 = scmp.ne.s32.totalorder %s37, %s38
      %p52 = scmp.eq.s32.totalorder %s30, 1
      %p53 = por %p51, %p52
      %p55 = scmp.ne.s32.totalorder %s38, %s54
      %p56 = scmp.eq.s32.totalorder %s30, 0
      %p57 = por %p55, %p56
      %s59 = sadd.s32 %s58, 1
      %p62 = scmp.eq.s32.totalorder %s24, 1
      %p63 = scmp.ne.s32.totalorder %s58, %s60
      %p64 = scmp.eq.s32.totalorder %s24, 0
      %p65 = por %p63, %p64
      %p66 = scmp.ne.s32.totalorder %s58, %s60
      %p67 = scmp.eq.s32.totalorder %s29, 1
      %p68 = por %p66, %p67
      %p69 = scmp.ne.s32.totalorder %s60, %s61
      %p70 = scmp.eq.s32.totalorder %s29, 0
      %p71 = por %p69, %p70
      %p72 = scmp.ne.s32.totalorder %s60, %s61
      %p73 = scmp.eq.s32.totalorder %s30, 1
      %p74 = por %p72, %p73
      %p76 = scmp.ne.s32.totalorder %s61, %s75
      %p77 = scmp.eq.s32.totalorder %s30, 0
      %p78 = por %p76, %p77
      %s80 = sadd.s32 %s79, 1
      %p83 = scmp.eq.s32.totalorder %s24, 1
      %p84 = scmp.ne.s32.totalorder %s79, %s81
      %p85 = scmp.eq.s32.totalorder %s24, 0
      %p86 = por %p84, %p85
      %p87 = scmp.ne.s32.totalorder %s79, %s81
      %p88 = scmp.eq.s32.totalorder %s29, 1
      %p89 = por %p87, %p88
      %p90 = scmp.ne.s32.totalorder %s81, %s82
      %p91 = scmp.eq.s32.totalorder %s29, 0
      %p92 = por %p90, %p91
      %p93 = scmp.ne.s32.totalorder %s81, %s82
      %p94 = scmp.eq.s32.totalorder %s30, 1
      %p95 = por %p93, %p94
      %p97 = scmp.ne.s32.totalorder %s82, %s96
      %p98 = scmp.eq.s32.totalorder %s30, 0
      %p99 = por %p97, %p98
      %s101 = sadd.s32 %s100, 1
      %p104 = scmp.eq.s32.totalorder %s24, 1
      %p105 = scmp.ne.s32.totalorder %s100, %s102
      %p106 = scmp.eq.s32.totalorder %s24, 0
      %p107 = por %p105, %p106
      %p108 = scmp.ne.s32.totalorder %s100, %s102
      %p109 = scmp.eq.s32.totalorder %s29, 1
      %p110 = por %p108, %p109
      %p111 = scmp.ne.s32.totalorder %s102, %s103
      %p112 = scmp.eq.s32.totalorder %s29, 0
      %p113 = por %p111, %p112
      %p114 = scmp.ne.s32.totalorder %s102, %s103
      %p115 = scmp.eq.s32.totalorder %s30, 1
      %p116 = por %p114, %p115
      %p118 = scmp.ne.s32.totalorder %s103, %s117
      %p119 = scmp.eq.s32.totalorder %s30, 0
      %p120 = por %p118, %p119
      %s122 = sadd.s32 %s121, 1
      %p125 = scmp.eq.s32.totalorder %s24, 1
      %p126 = scmp.ne.s32.totalorder %s121, %s123
      %p127 = scmp.eq.s32.totalorder %s24, 0
      %p128 = por %p126, %p127
      %p129 = scmp.ne.s32.totalorder %s121, %s123
      %p130 = scmp.eq.s32.totalorder %s29, 1
      %p131 = por %p129, %p130
      %p132 = scmp.ne.s32.totalorder %s123, %s124
      %p133 = scmp.eq.s32.totalorder %s29, 0
      %p134 = por %p132, %p133
      %p135 = scmp.ne.s32.totalorder %s123, %s124
      %p136 = scmp.eq.s32.totalorder %s30, 1
      %p137 = por %p135, %p136
      %p139 = scmp.ne.s32.totalorder %s124, %s138
      %p140 = scmp.eq.s32.totalorder %s30, 0
      %p141 = por %p139, %p140
      %s142 = ssub.s32 %s24, %s31
      %p143 = scmp.eq.s32.totalorder %s142, 0
      %s145 = sadd.s32 %s144, 1
      %s146 = scalar_select %p143, %s144, %s145
      %p149 = pneg %p143
      %p150 = scmp.eq.s32.totalorder %s24, 1
      %p151 = por %p149, %p150
      %p152 = scmp.ne.s32.totalorder %s144, %s147
      %p153 = scmp.eq.s32.totalorder %s24, 0
      %p154 = por %p152, %p153
      %p155 = scmp.ne.s32.totalorder %s144, %s147
      %p156 = scmp.eq.s32.totalorder %s29, 1
      %p157 = por %p155, %p156
      %p158 = scmp.ne.s32.totalorder %s147, %s148
      %p159 = scmp.eq.s32.totalorder %s29, 0
      %p160 = por %p158, %p159
      %p161 = scmp.ne.s32.totalorder %s147, %s148
      %p162 = scmp.eq.s32.totalorder %s30, 1
      %p163 = por %p161, %p162
      %p165 = scmp.ne.s32.totalorder %s148, %s164
      %p166 = scmp.eq.s32.totalorder %s30, 0
      %p167 = por %p165, %p166
      %s168 = ssub.s32 %s24, %s31
      %p169 = scmp.eq.s32.totalorder %s168, 0
      %s171 = sadd.s32 %s170, 1
      %s172 = scalar_select %p169, %s170, %s171
      %p175 = pneg %p169
      %p176 = scmp.eq.s32.totalorder %s24, 1
      %p177 = por %p175, %p176
      %p178 = scmp.ne.s32.totalorder %s170, %s173
      %p179 = scmp.eq.s32.totalorder %s24, 0
      %p180 = por %p178, %p179
      %p181 = scmp.ne.s32.totalorder %s170, %s173
      %p182 = scmp.eq.s32.totalorder %s29, 1
      %p183 = por %p181, %p182
      %p184 = scmp.ne.s32.totalorder %s173, %s174
      %p185 = scmp.eq.s32.totalorder %s29, 0
      %p186 = por %p184, %p185
      %p187 = scmp.ne.s32.totalorder %s173, %s174
      %p188 = scmp.eq.s32.totalorder %s30, 1
      %p189 = por %p187, %p188
      %p191 = scmp.ne.s32.totalorder %s174, %s190
      %p192 = scmp.eq.s32.totalorder %s30, 0
      %p193 = por %p191, %p192
      %p194 = scmp.le.s32.totalorder 1, %s24
      %p195 = scmp.lt.s32.totalorder %s24, 3
      %p196 = pnand %p194, %p195
      %p197 = pneg %p196
      // Predicated region
      $region9: #{tpu_custom_call.1} parent=5 // pred_check
        _
      $region10: #{tpu_custom_call.1} parent=5 // pred_check_branch
        %199 = sbr.rel (%p196) target = $region12
      $region11: #{tpu_custom_call.1} parent=5 // pred_region
        %s200 = ssub.s32 %s24, 1
        // Predicated region
        $region13: #{tpu_custom_call.1} parent=11 // pred_check
          %p201 = pneg %p71
        $region14: #{tpu_custom_call.1} parent=11 // pred_check_branch
          %203 = sbr.rel (%p201) target = $region16
        $region15: #{tpu_custom_call.1} parent=11 // pred_region
          %s205 = ssub.s32 512, 512
          %206 = vsyncadd [#allocation7], %s205
          %s207 = sshll.u32 [#allocation6], 4
          %s208 = int_to_ptr.vmem [resolvable:$true] %s207
          %213 = dma.hbm_to_vmem [thread:$0]  %s1, 512, %s208, [#allocation7], 128, 128, 8
        $region16: #{tpu_custom_call.1} parent=11 // pred_fallthru
          _
        // Predicated region
        $region17: #{tpu_custom_call.1} parent=11 // pred_check
          %p214 = pneg %p92
        $region18: #{tpu_custom_call.1} parent=11 // pred_check_branch
          %216 = sbr.rel (%p214) target = $region20
        $region19: #{tpu_custom_call.1} parent=11 // pred_region
          _
        $region20: #{tpu_custom_call.1} parent=11 // pred_fallthru
          _
        // Predicated region
        $region21: #{tpu_custom_call.1} parent=11 // pred_check
          %p217 = pneg %p113
        $region22: #{tpu_custom_call.1} parent=11 // pred_check_branch
          %219 = sbr.rel (%p217) target = $region24
        $region23: #{tpu_custom_call.1} parent=11 // pred_region
          _
        $region24: #{tpu_custom_call.1} parent=11 // pred_fallthru
          _
        // Predicated region
        $region25: #{tpu_custom_call.1} parent=11 // pred_check
          %p220 = pneg %p134
        $region26: #{tpu_custom_call.1} parent=11 // pred_check_branch
          %222 = sbr.rel (%p220) target = $region28
        $region27: #{tpu_custom_call.1} parent=11 // pred_region
          _
        $region28: #{tpu_custom_call.1} parent=11 // pred_fallthru
          _
      $region12: #{tpu_custom_call.1} parent=5 // pred_fallthru
        _
      %p223 = scmp.lt.s32.totalorder %s24, 2
      // Predicated region
      $region29: #{tpu_custom_call.1} parent=5 // pred_check
        %p224 = pneg %p223
      $region30: #{tpu_custom_call.1} parent=5 // pred_check_branch
        %226 = sbr.rel (%p224) target = $region32
      $region31: #{tpu_custom_call.1} parent=5 // pred_region
        // Predicated region
        $region33: #{tpu_custom_call.1} parent=31 // pred_check
          %p227 = pneg %p44
        $region34: #{tpu_custom_call.1} parent=31 // pred_check_branch
          %229 = sbr.rel (%p227) target = $region36
        $region35: #{tpu_custom_call.1} parent=31 // pred_region
          %s230 = sand.u32 %s34, 1
          %s231 = scalar_lea.sflag [#allocation4], %s230
          %s232 = sand.u32 %s34, 1
          %s233 = smul.addr %s232, 8
          %s234 = scalar_lea.vmem [#allocation3], %s233
          %s236 = ssub.s32 128, 128
          %237 = vsyncadd %s231, %s236
          %s238 = smul.addr %s24, 128
          %s239 = scalar_lea.hbm %s0, %s238
          %s241 = sshll.u32 %s234, 4
          %s242 = int_to_ptr.vmem [resolvable:$true] %s241
          %244 = dma.hbm_to_vmem [thread:$0]  %s239, 128, %s242, %s231
        $region36: #{tpu_custom_call.1} parent=31 // pred_fallthru
          _
      $region32: #{tpu_custom_call.1} parent=5 // pred_fallthru
        _
      %p245 = scmp.le.s32.totalorder 1, %s24
      %p246 = scmp.lt.s32.totalorder %s24, 3
      %p247 = pnand %p245, %p246
      %p248 = pneg %p247
      // Predicated region
      $region37: #{tpu_custom_call.1} parent=5 // pred_check
        _
      $region38: #{tpu_custom_call.1} parent=5 // pred_check_branch
        %250 = sbr.rel (%p247) target = $region40
      $region39: #{tpu_custom_call.1} parent=5 // pred_region
        %s251 = ssub.s32 %s24, 1
        %s252 = sand.u32 %s37, 1
        %s253 = scalar_lea.sflag [#allocation4], %s252
        %s254 = sand.u32 %s37, 1
        %s255 = smul.addr %s254, 8
        %s256 = scalar_lea.vmem [#allocation3], %s255
        // Predicated region
        $region41: #{tpu_custom_call.1} parent=39 // pred_check
          %p257 = pneg %p50
        $region42: #{tpu_custom_call.1} parent=39 // pred_check_branch
          %259 = sbr.rel (%p257) target = $region44
        $region43: #{tpu_custom_call.1} parent=39 // pred_region
          %260 = dma.done %s253, 128
        $region44: #{tpu_custom_call.1} parent=39 // pred_fallthru
          _
        // Predicated region
        $region45: #{tpu_custom_call.1} parent=39 // pred_check
          %p261 = pneg %p71
        $region46: #{tpu_custom_call.1} parent=39 // pred_check_branch
          %263 = sbr.rel (%p261) target = $region48
        $region47: #{tpu_custom_call.1} parent=39 // pred_region
          %264 = dma.done [#allocation7], 512
        $region48: #{tpu_custom_call.1} parent=39 // pred_fallthru
          _
        %s265 = sand.u32 %s37, 1
        %s266 = scalar_lea.sflag [#allocation4], %s265
        %s267 = sand.u32 %s37, 1
        %s268 = smul.addr %s267, 8
        %s269 = scalar_lea.vmem [#allocation3], %s268
        %p270 = pneg %p50
        %p271 = pneg %p47
        %p272 = pneg %p71
        %p273 = pneg %p68
        %p274 = pneg %p92
        %p275 = pneg %p89
        %p276 = pneg %p113
        %p277 = pneg %p110
        %p278 = pneg %p134
        %p279 = pneg %p131
        %p280 = pneg %p160
        %p281 = pneg %p157
        %s282 = sand.u32 %s147, 1
        %s283 = scalar_lea.sflag [#allocation5], %s282
        %s284 = sand.u32 %s147, 1
        %s285 = scalar_lea.vmem [#allocation8], %s284
        %p286 = pneg %p186
        %p287 = pneg %p183
        %s288 = sand.u32 %s173, 1
        %s289 = scalar_lea.sflag [#allocation10], %s288
        %s290 = sand.u32 %s173, 1
        %s291 = scalar_lea.vmem [#allocation9], %s290
        %v292 = vld [vmem:[%s256] sm:$0xff]
        %v293 = vld [vmem:[#allocation6] sm:$0xff]
        %v294 = vld [vmem:[#allocation6 + $0x8] sm:$0xff]
        %v295 = vld [vmem:[#allocation6 + $0x10] sm:$0xff]
        %v296 = vld [vmem:[#allocation6 + $0x18] sm:$0xff]
        %v297 = vld [vmem:[%s2] sm:$0x1]
        %v299 = vlaneseq
        %v300 = vshrl.u32 %v299, 7
        %v301 = vsub.s32 0, %v300
        %v302 = vrot.slane %v297, %v301
        %vm304 = vcmask 261120
        %v306 = vsel %vm304, %v292, 0
        %308 = vmatprep.subr.mxu0 0.0
        %309 = vmatpush1.msra.mxu0 %v293
        %310 = vmatprep.subr.mxu0 0.0
        %311 = vmatpush1.msra.mxu0 %v294
        %312 = vmatprep.subr.mxu0 0.0
        %313 = vmatpush1.msra.mxu0 %v295
        %314 = vmatprep.subr.mxu0 0.0
        %315 = vmatpush1.msra.mxu0 %v296
        %316 = vmatprep.subr.mxu0 0.0
        %317 = vmatpush1.msra.mxu0 0.0
        %318 = vmatprep.subr.mxu0 0.0
        %319 = vmatpush1.msra.mxu0 0.0
        %320 = vmatprep.subr.mxu0 0.0
        %321 = vmatpush1.msra.mxu0 0.0
        %322 = vmatprep.subr.mxu0 0.0
        %323 = vmatpush1.msra.mxu0 0.0
        %324 = vmatprep.subr.mxu0 0.0
        %325 = vmatpush1.msra.mxu0 0.0
        %326 = vmatprep.subr.mxu0 0.0
        %327 = vmatpush1.msra.mxu0 0.0
        %328 = vmatprep.subr.mxu0 0.0
        %329 = vmatpush1.msra.mxu0 0.0
        %330 = vmatprep.subr.mxu0 0.0
        %331 = vmatpush1.msra.mxu0 0.0
        %332 = vmatprep.subr.mxu0 0.0
        %333 = vmatpush1.msra.mxu0 0.0
        %334 = vmatprep.subr.mxu0 0.0
        %335 = vmatpush1.msra.mxu0 0.0
        %336 = vmatprep.subr.mxu0 0.0
        %337 = vmatpush1.msra.mxu0 0.0
        %338 = vmatprep.subr.mxu0 0.0
        %339 = vmatpush1.msra.mxu0 0.0
        %340 = vmatprep.subr.mxu0 0.0
        %341 = vmatpush1.msra.mxu0 0.0
        %342 = vmatprep.subr.mxu0 0.0
        %343 = vmatpush1.msra.mxu0 0.0
        %344 = vmatprep.subr.mxu0 0.0
        %345 = vmatpush1.msra.mxu0 0.0
        %346 = vmatprep.subr.mxu0 0.0
        %347 = vmatpush1.msra.mxu0 0.0
        %348 = vmatprep.subr.mxu0 0.0
        %349 = vmatpush1.msra.mxu0 0.0
        %350 = vmatprep.subr.mxu0 0.0
        %351 = vmatpush1.msra.mxu0 0.0
        %352 = vmatprep.subr.mxu0 0.0
        %353 = vmatpush1.msra.mxu0 0.0
        %354 = vmatprep.subr.mxu0 0.0
        %355 = vmatpush1.msra.mxu0 0.0
        %356 = vmatprep.subr.mxu0 0.0
        %357 = vmatpush1.msra.mxu0 0.0
        %358 = vmatprep.subr.mxu0 0.0
        %359 = vmatpush1.msra.mxu0 0.0
        %360 = vmatprep.subr.mxu0 0.0
        %361 = vmatpush1.msra.mxu0 0.0
        %362 = vmatprep.subr.mxu0 0.0
        %363 = vmatpush1.msra.mxu0 0.0
        %364 = vmatprep.subr.mxu0 0.0
        %365 = vmatpush1.msra.mxu0 0.0
        %366 = vmatprep.subr.mxu0 0.0
        %367 = vmatpush1.msra.mxu0 0.0
        %368 = vmatprep.subr.mxu0 0.0
        %369 = vmatpush1.msra.mxu0 0.0
        %370 = vmatprep.subr.mxu0 0.0
        %371 = vmatpush1.msra.mxu0 0.0
        %372 = vmatprep.mubr.f32.mxu0 0.0
        %373 = vmatmul.mubr.f32.gmra.mrb[0].mxu0 %v306
        %v374 = vpop.f32.mrb[0].mxu0
        %v375 = vadd.f32 %v302, %v374
        %v376 = vpop.f32.mrb[0].mxu0
        %377 = vdwg.mxu0
        %v378 = vtanh.pop %v375
        %v379 = vxor.u32 %v375, 2147483648
        %v380 = vmul.f32 %v379, 1.442695
        %v381 = vpow.pop %v380
        %v382 = vadd.f32 %v381, 1.0
        %v383 = vrcp.pop %v382
        %v384 = vmul.f32 1.0, %v383
        %386 = vrot.lane.b32.xlu0 %v384, 96
        %v387 = vpop.permute.xlu0 %386
        %v389 = vmul.f32 %v378, %v387
        %v390 = vld [vmem:[%s3] sm:$0x1]
        %s391 = sld [smem:[#allocation2]]
        %v392 = vstv %s391
        %v394 = vsel %vm304, %v390, 0
        %v397 = vsel %vm304, %v389, 0
        %399 = vmatprep.subr.mxu0 0.0
        %400 = vmatpush1.xpose.msra.mxu0 %v397
        %401 = vmatprep.subr.mxu0 0.0
        %402 = vmatpush1.xpose.msra.mxu0 0.0
        %403 = vmatprep.subr.mxu0 0.0
        %404 = vmatpush1.xpose.msra.mxu0 0.0
        %405 = vmatprep.subr.mxu0 0.0
        %406 = vmatpush1.xpose.msra.mxu0 0.0
        %407 = vmatprep.subr.mxu0 0.0
        %408 = vmatpush1.xpose.msra.mxu0 0.0
        %409 = vmatprep.subr.mxu0 0.0
        %410 = vmatpush1.xpose.msra.mxu0 0.0
        %411 = vmatprep.subr.mxu0 0.0
        %412 = vmatpush1.xpose.msra.mxu0 0.0
        %413 = vmatprep.subr.mxu0 0.0
        %414 = vmatpush1.xpose.msra.mxu0 0.0
        %415 = vmatprep.subr.mxu0 0.0
        %416 = vmatpush1.xpose.msra.mxu0 0.0
        %417 = vmatprep.subr.mxu0 0.0
        %418 = vmatpush1.xpose.msra.mxu0 0.0
        %419 = vmatprep.subr.mxu0 0.0
        %420 = vmatpush1.xpose.msra.mxu0 0.0
        %421 = vmatprep.subr.mxu0 0.0
        %422 = vmatpush1.xpose.msra.mxu0 0.0
        %423 = vmatprep.subr.mxu0 0.0
        %424 = vmatpush1.xpose.msra.mxu0 0.0
        %425 = vmatprep.subr.mxu0 0.0
        %426 = vmatpush1.xpose.msra.mxu0 0.0
        %427 = vmatprep.subr.mxu0 0.0
        %428 = vmatpush1.xpose.msra.mxu0 0.0
        %429 = vmatprep.subr.mxu0 0.0
        %430 = vmatpush1.xpose.msra.mxu0 0.0
        %431 = vmatprep.subr.mxu0 0.0
        %432 = vmatpush1.xpose.msra.mxu0 0.0
        %433 = vmatprep.subr.mxu0 0.0
        %434 = vmatpush1.xpose.msra.mxu0 0.0
        %435 = vmatprep.subr.mxu0 0.0
        %436 = vmatpush1.xpose.msra.mxu0 0.0
        %437 = vmatprep.subr.mxu0 0.0
        %438 = vmatpush1.xpose.msra.mxu0 0.0
        %439 = vmatprep.subr.mxu0 0.0
        %440 = vmatpush1.xpose.msra.mxu0 0.0
        %441 = vmatprep.subr.mxu0 0.0
        %442 = vmatpush1.xpose.msra.mxu0 0.0
        %443 = vmatprep.subr.mxu0 0.0
        %444 = vmatpush1.xpose.msra.mxu0 0.0
        %445 = vmatprep.subr.mxu0 0.0
        %446 = vmatpush1.xpose.msra.mxu0 0.0
        %447 = vmatprep.subr.mxu0 0.0
        %448 = vmatpush1.xpose.msra.mxu0 0.0
        %449 = vmatprep.subr.mxu0 0.0
        %450 = vmatpush1.xpose.msra.mxu0 0.0
        %451 = vmatprep.subr.mxu0 0.0
        %452 = vmatpush1.xpose.msra.mxu0 0.0
        %453 = vmatprep.subr.mxu0 0.0
        %454 = vmatpush1.xpose.msra.mxu0 0.0
        %455 = vmatprep.subr.mxu0 0.0
        %456 = vmatpush1.xpose.msra.mxu0 0.0
        %457 = vmatprep.subr.mxu0 0.0
        %458 = vmatpush1.xpose.msra.mxu0 0.0
        %459 = vmatprep.subr.mxu0 0.0
        %460 = vmatpush1.xpose.msra.mxu0 0.0
        %461 = vmatprep.subr.mxu0 0.0
        %462 = vmatpush1.xpose.msra.mxu0 0.0
        %463 = vmatprep.mubr.f32.mxu0 0.0
        %464 = vmatmul.mubr.f32.gmra.mrb[0].mxu0 %v394
        %v465 = vpop.f32.mrb[0].mxu0
        %v466 = vadd.f32 %v392, %v465
        %v467 = vpop.f32.mrb[0].mxu0
        %468 = vdwg.mxu0
        %vm469 = vcmask 57344
        %v470 = vsel %vm469, %v466, -inf
        %471 = vmax.xlane.f32.xlu0 %v470
        %v472 = vpop.xlane.xlu0 %471
        %v473 = vsub.f32 %v466, %v472
        %v474 = vmul.f32 %v473, 1.442695
        %v475 = vpow.pop %v474
        %v476 = vsel %vm469, %v475, 0.0
        %477 = vadd.xlane.f32.xlu0 %v476
        %v478 = vpop.xlane.xlu0 %477
        %v479 = vrcp.pop %v478
        %v480 = vmul.f32 %v475, %v479
        %vm481 = vcmask 64512
        %v483 = vsel %vm481, %v480, 0
        %485 = vmatprep.subr.mxu0 0.0
        %486 = vmatpush1.msra.mxu0 %v292
        %487 = vmatprep.subr.mxu0 0.0
        %488 = vmatpush1.msra.mxu0 0.0
        %489 = vmatprep.subr.mxu0 0.0
        %490 = vmatpush1.msra.mxu0 0.0
        %491 = vmatprep.subr.mxu0 0.0
        %492 = vmatpush1.msra.mxu0 0.0
        %493 = vmatprep.subr.mxu0 0.0
        %494 = vmatpush1.msra.mxu0 0.0
        %495 = vmatprep.subr.mxu0 0.0
        %496 = vmatpush1.msra.mxu0 0.0
        %497 = vmatprep.subr.mxu0 0.0
        %498 = vmatpush1.msra.mxu0 0.0
        %499 = vmatprep.subr.mxu0 0.0
        %500 = vmatpush1.msra.mxu0 0.0
        %501 = vmatprep.subr.mxu0 0.0
        %502 = vmatpush1.msra.mxu0 0.0
        %503 = vmatprep.subr.mxu0 0.0
        %504 = vmatpush1.msra.mxu0 0.0
        %505 = vmatprep.subr.mxu0 0.0
        %506 = vmatpush1.msra.mxu0 0.0
        %507 = vmatprep.subr.mxu0 0.0
        %508 = vmatpush1.msra.mxu0 0.0
        %509 = vmatprep.subr.mxu0 0.0
        %510 = vmatpush1.msra.mxu0 0.0
        %511 = vmatprep.subr.mxu0 0.0
        %512 = vmatpush1.msra.mxu0 0.0
        %513 = vmatprep.subr.mxu0 0.0
        %514 = vmatpush1.msra.mxu0 0.0
        %515 = vmatprep.subr.mxu0 0.0
        %516 = vmatpush1.msra.mxu0 0.0
        %517 = vmatprep.subr.mxu0 0.0
        %518 = vmatpush1.msra.mxu0 0.0
        %519 = vmatprep.subr.mxu0 0.0
        %520 = vmatpush1.msra.mxu0 0.0
        %521 = vmatprep.subr.mxu0 0.0
        %522 = vmatpush1.msra.mxu0 0.0
        %523 = vmatprep.subr.mxu0 0.0
        %524 = vmatpush1.msra.mxu0 0.0
        %525 = vmatprep.subr.mxu0 0.0
        %526 = vmatpush1.msra.mxu0 0.0
        %527 = vmatprep.subr.mxu0 0.0
        %528 = vmatpush1.msra.mxu0 0.0
        %529 = vmatprep.subr.mxu0 0.0
        %530 = vmatpush1.msra.mxu0 0.0
        %531 = vmatprep.subr.mxu0 0.0
        %532 = vmatpush1.msra.mxu0 0.0
        %533 = vmatprep.subr.mxu0 0.0
        %534 = vmatpush1.msra.mxu0 0.0
        %535 = vmatprep.subr.mxu0 0.0
        %536 = vmatpush1.msra.mxu0 0.0
        %537 = vmatprep.subr.mxu0 0.0
        %538 = vmatpush1.msra.mxu0 0.0
        %539 = vmatprep.subr.mxu0 0.0
        %540 = vmatpush1.msra.mxu0 0.0
        %541 = vmatprep.subr.mxu0 0.0
        %542 = vmatpush1.msra.mxu0 0.0
        %543 = vmatprep.subr.mxu0 0.0
        %544 = vmatpush1.msra.mxu0 0.0
        %545 = vmatprep.subr.mxu0 0.0
        %546 = vmatpush1.msra.mxu0 0.0
        %547 = vmatprep.subr.mxu0 0.0
        %548 = vmatpush1.msra.mxu0 0.0
        %549 = vmatprep.mubr.f32.mxu0 0.0
        %550 = vmatmul.mubr.f32.gmra.mrb[0].mxu0 %v483
        %v551 = vpop.f32.mrb[0].mxu0
        %v552 = vadd.f32 0.0, %v551
        %v553 = vpop.f32.mrb[0].mxu0
        %554 = vdwg.mxu0
        %vm555 = vcmask 253952
        %556 = vst.msk [vmem:[%s285] sm:$0x1] %vm555, %v552
        %557 = vst.msk [vmem:[%s291] sm:$0x1] %vm469, %v480
        %s558 = sand.u32 %s147, 1
        %s559 = scalar_lea.sflag [#allocation5], %s558
        %s560 = sand.u32 %s147, 1
        %s561 = scalar_lea.vmem [#allocation8], %s560
        %s562 = sand.u32 %s173, 1
        %s563 = scalar_lea.sflag [#allocation10], %s562
        %s564 = sand.u32 %s173, 1
        %s565 = scalar_lea.vmem [#allocation9], %s564
        // Predicated region
        $region49: #{tpu_custom_call.1} parent=39 // pred_check
          %p566 = pneg %p157
        $region50: #{tpu_custom_call.1} parent=39 // pred_check_branch
          %568 = sbr.rel (%p566) target = $region52
        $region51: #{tpu_custom_call.1} parent=39 // pred_region
          %s570 = ssub.s32 16, 16
          %571 = vsyncadd %s559, %s570
          %s572 = smul.addr %s29, 16
          %s573 = scalar_lea.hbm %s5, %s572
          %s575 = sshll.u32 %s561, 4
          %s576 = int_to_ptr.vmem [resolvable:$true] %s575
          %578 = dma.vmem_to_hbm [thread:$0]  %s576, 16, %s573, %s559
        $region52: #{tpu_custom_call.1} parent=39 // pred_fallthru
          _
        // Predicated region
        $region53: #{tpu_custom_call.1} parent=39 // pred_check
          %p579 = pneg %p183
        $region54: #{tpu_custom_call.1} parent=39 // pred_check_branch
          %581 = sbr.rel (%p579) target = $region56
        $region55: #{tpu_custom_call.1} parent=39 // pred_region
          %s583 = ssub.s32 16, 16
          %584 = vsyncadd %s563, %s583
          %s585 = smul.addr %s29, 16
          %s586 = scalar_lea.hbm %s6, %s585
          %s588 = sshll.u32 %s565, 4
          %s589 = int_to_ptr.vmem [resolvable:$true] %s588
          %591 = dma.vmem_to_hbm [thread:$0]  %s589, 16, %s586, %s563
        $region56: #{tpu_custom_call.1} parent=39 // pred_fallthru
          _
      $region40: #{tpu_custom_call.1} parent=5 // pred_fallthru
        _
      %p592 = scmp.le.s32.totalorder 2, %s24
      // Predicated region
      $region57: #{tpu_custom_call.1} parent=5 // pred_check
        %p593 = pneg %p592
      $region58: #{tpu_custom_call.1} parent=5 // pred_check_branch
        %595 = sbr.rel (%p593) target = $region60
      $region59: #{tpu_custom_call.1} parent=5 // pred_region
        %s596 = ssub.s32 %s24, 2
        // Predicated region
        $region61: #{tpu_custom_call.1} parent=59 // pred_check
          %p597 = pneg %p163
        $region62: #{tpu_custom_call.1} parent=59 // pred_check_branch
          %599 = sbr.rel (%p597) target = $region64
        $region63: #{tpu_custom_call.1} parent=59 // pred_region
          %s600 = sand.u32 %s148, 1
          %s601 = scalar_lea.sflag [#allocation5], %s600
          %s602 = sand.u32 %s148, 1
          %s603 = scalar_lea.vmem [#allocation8], %s602
          %604 = dma.done %s601, 16
        $region64: #{tpu_custom_call.1} parent=59 // pred_fallthru
          _
        // Predicated region
        $region65: #{tpu_custom_call.1} parent=59 // pred_check
          %p605 = pneg %p189
        $region66: #{tpu_custom_call.1} parent=59 // pred_check_branch
          %607 = sbr.rel (%p605) target = $region68
        $region67: #{tpu_custom_call.1} parent=59 // pred_region
          %s608 = sand.u32 %s174, 1
          %s609 = scalar_lea.sflag [#allocation10], %s608
          %s610 = sand.u32 %s174, 1
          %s611 = scalar_lea.vmem [#allocation9], %s610
          %612 = dma.done %s609, 16
        $region68: #{tpu_custom_call.1} parent=59 // pred_fallthru
          _
      $region60: #{tpu_custom_call.1} parent=5 // pred_fallthru
        _
    $region6: #{tpu_custom_call.1} parent=1 // loop_footer
      %s28 = sadd.s32 1, %s24
    $region7: #{tpu_custom_call.1} parent=1 // loop_footer_branch
      %23 = sbr.rel target = $region3
    $region8: #{tpu_custom_call.1} parent=1 // loop_exit
      _
    %613 = vsyncpa [#allocation4], 1
    %s614 = scalar_lea.sflag [#allocation4], 1
    %615 = vsyncpa %s614, 1
    %616 = vsyncpa [#allocation7], 1
    %617 = vsyncpa [#allocation5], 1
    %s618 = scalar_lea.sflag [#allocation5], 1
    %619 = vsyncpa %s618, 1
    %620 = vsyncpa [#allocation10], 1
    %s621 = scalar_lea.sflag [#allocation10], 1
    %622 = vsyncpa %s621, 1

</llo_original>
